<compile_context>
chip_gen: v6e
topology: v6e:2x2x1
jax: 0.10.0
libtpu: 0.0.40
codegen_flags: <defaults>
</compile_context>

<pallas_src>
import math
import jax
import jax.numpy as jnp
from jax.experimental import pallas as pl
from jax.experimental.pallas import tpu as pltpu

TWO_PI = 2.0 * math.pi
LEAKY_SLOPE = 0.01      # nn.LeakyReLU() default negative_slope
FOURIER_IN_DIM = 44     # hardcoded in the reference module (=> x.shape[-1] must be 22)


def _round_up(v, m):
    return -(-v // m) * m


def _sincos_2pi(x):
    """(sin(2*pi*x), cos(2*pi*x)) with one shared range reduction.

    x is in 'turns'. Fold to r in [-1/4, 1/4] plus a sign:
        a = x - round(x)            in [-1/2, 1/2)
        n = round(2a)               in {-1, 0, 1}
        r = a - n/2, sign = (-1)^n
        sin(2*pi*x) = sign * sin(2*pi*r),  cos(2*pi*x) = sign * cos(2*pi*r)
    with theta = 2*pi*r in [-pi/2, pi/2], evaluated by short Horner polynomials
    (sin through theta^11, cos through theta^12; max abs error ~1e-7).
    Everything is elementwise VPU work; no library sin/cos double reduction.
    """
    a = x - jnp.floor(x + 0.5)                 # [-0.5, 0.5)
    n = jnp.floor(2.0 * a + 0.5)               # {-1, 0, 1}
    r = a - 0.5 * n                            # [-0.25, 0.25]
    sign = 1.0 - 2.0 * jnp.abs(n)              # +1 if n == 0 else -1
    t = TWO_PI * r                             # [-pi/2, pi/2]
    t2 = t * t

    sp = jnp.float32(-1.0 / 39916800.0)
    sp = sp * t2 + 1.0 / 362880.0
    sp = sp * t2 - 1.0 / 5040.0
    sp = sp * t2 + 1.0 / 120.0
    sp = sp * t2 - 1.0 / 6.0
    sin_t = t + (t * t2) * sp

    cp = jnp.float32(1.0 / 479001600.0)
    cp = cp * t2 - 1.0 / 3628800.0
    cp = cp * t2 + 1.0 / 40320.0
    cp = cp * t2 - 1.0 / 720.0
    cp = cp * t2 + 1.0 / 24.0
    cp = cp * t2 - 0.5
    cos_t = 1.0 + t2 * cp

    return sign * sin_t, sign * cos_t


def _fourier_mlp_kernel(x_ref, *refs):
    """refs = (W1_sin, W1_cos, b1, W2, b2, ..., WL, bL, o_ref).

    Transposed layout: x_ref is (d_in, row_tile); activations are (feat, row_tile)
    with tokens lane-dense. Weights are torch-oriented (out, in); biases (out, 1)
    broadcast along lanes.
    """
    o_ref = refs[-1]
    w1s_ref, w1c_ref, b1_ref = refs[0], refs[1], refs[2]
    rest = refs[3:-1]                       # (W2, b2, ..., WL, bL)

    # Fourier feature map fused with the first Linear; shared sin/cos reduction.
    x = x_ref[...].astype(jnp.float32)                      # (d_in, row_tile)
    s, c = _sincos_2pi(x)
    h = (jnp.dot(w1s_ref[...], s, preferred_element_type=jnp.float32)
         + jnp.dot(w1c_ref[...], c, preferred_element_type=jnp.float32)
         + b1_ref[...])                                      # (h1, row_tile)

    # Remaining layers: LeakyReLU (single VPU max) between Linears (MXU).
    n_remaining = len(rest) // 2
    for li in range(n_remaining):
        h = jnp.maximum(h, LEAKY_SLOPE * h)                  # leaky_relu, slope<1
        w = rest[2 * li][...]                                # (out, in)
        b = rest[2 * li + 1][...]                            # (out, 1)
        h = jnp.dot(w, h, preferred_element_type=jnp.float32) + b

    o_ref[...] = h.astype(o_ref.dtype)                       # (out_dim, row_tile)


def fourier_mlp_t(x_t, params, *, row_tile=4096):
    """Channel-major entry point: x_t is (22, N); returns (out_dim, N).

    Preferred when the surrounding model already keeps activations feature-major:
    it avoids the HBM relayout (transpose) passes that `fourier_mlp` performs.
    params: [W1, b1, ..., WL, bL] in torch orientation, Wi (out, in), bi (out,).
    """
    d_in, n_rows = x_t.shape
    assert 2 * d_in == FOURIER_IN_DIM, (
        f"module hardcodes in_dim=44 => feature dim must be {FOURIER_IN_DIM // 2}")
    out_dim = params[-2].shape[0]

    # row_tile: multiple of 128 (BlockSpec (8,128) rule); clamp so there are at
    # least 2 grid steps when there is enough work (v7x 2-TC sharding), while big
    # inputs keep the large tile to amortize the ~0.35us/grid-step overhead.
    row_tile = max(128, (int(row_tile) // 128) * 128)
    half = _round_up((n_rows + 1) // 2, 128)
    row_tile = min(row_tile, max(128, half))

    n_tiles = -(-n_rows // row_tile)
    n_pad = n_tiles * row_tile
    if n_pad != n_rows:
        # Pad rows compute finite garbage and are sliced off below.
        x_t = jnp.pad(x_t, ((0, 0), (0, n_pad - n_rows)))

    # Kernel-side parameters: W1 split into sin/cos halves (removes the lane-axis
    # concat entirely); biases as (out, 1) columns for lane broadcast.
    w1, b1 = params[0], params[1]
    kernel_params = [w1[:, :d_in], w1[:, d_in:], b1.reshape(-1, 1)]
    for li in range(1, len(params) // 2):
        kernel_params.append(params[2 * li])                 # (out, in)
        kernel_params.append(params[2 * li + 1].reshape(-1, 1))

    # Lane-dense input/output blocks; weights/biases are full-array resident blocks.
    in_specs = [pl.BlockSpec((d_in, row_tile), lambda i: (0, i))]
    for p in kernel_params:
        in_specs.append(pl.BlockSpec(p.shape, lambda i: (0, 0)))
    out_spec = pl.BlockSpec((out_dim, row_tile), lambda i: (0, i))

    out_t = pl.pallas_call(
        _fourier_mlp_kernel,
        out_shape=jax.ShapeDtypeStruct((out_dim, n_pad), jnp.float32),
        grid_spec=pltpu.PrefetchScalarGridSpec(
            num_scalar_prefetch=0,
            grid=(n_tiles,),
            in_specs=in_specs,
            out_specs=out_spec,
        ),
        compiler_params=pltpu.CompilerParams(dimension_semantics=("parallel",)),
    )(x_t, *kernel_params)

    return out_t[:, :n_rows]


def fourier_mlp(x, params, *, row_tile=4096):
    """Module-compatible entry point: x is (..., 22); returns (..., out_dim)."""
    lead_shape = x.shape[:-1]
    d_in = x.shape[-1]
    assert 2 * d_in == FOURIER_IN_DIM, (
        f"module hardcodes in_dim=44 => x.shape[-1] must be {FOURIER_IN_DIM // 2}")

    xf = x.reshape(-1, d_in).astype(jnp.float32)
    out_dim = params[-2].shape[0]

    # TODO(synk): these two transposes are full HBM relayout passes outside the
    # kernel; callers that can keep activations feature-major should call
    # fourier_mlp_t directly and skip them (biggest remaining HBM win, esp. v5e).
    out_t = fourier_mlp_t(xf.T, params, row_tile=row_tile)   # (out_dim, N)
    return out_t.T.reshape(*lead_shape, out_dim)


def init_params(key, hidden_list, out_dim):
    """nn.Linear-style init, torch orientation: W (out, in), b (out,)."""
    params = []
    lastv = FOURIER_IN_DIM
    for h in hidden_list + [out_dim]:
        key, kw, kb = jax.random.split(key, 3)
        bound = 1.0 / math.sqrt(lastv)
        w = jax.random.uniform(kw, (h, lastv), minval=-bound, maxval=bound,
                               dtype=jnp.float32)
        b = jax.random.uniform(kb, (h,), minval=-bound, maxval=bound,
                               dtype=jnp.float32)
        params += [w, b]
        lastv = h
    return params


def _reference(x, params):
    """Pure-JAX reference mirroring the PyTorch forward (library sin/cos)."""
    lead_shape = x.shape[:-1]
    xx = TWO_PI * x
    h = jnp.concatenate([jnp.sin(xx), jnp.cos(xx)], axis=-1)
    h = h.reshape(-1, h.shape[-1])
    n_layers = len(params) // 2
    for li in range(n_layers):
        w, b = params[2 * li], params[2 * li + 1]
        h = h @ w.T + b
        if li < n_layers - 1:
            h = jnp.where(h > 0, h, LEAKY_SLOPE * h)
    return h.reshape(*lead_shape, -1)


if __name__ == "__main__":
    key = jax.random.PRNGKey(0)
    d_in = 22                        # 22 -> sin/cos concat -> 44 (module's in_dim)
    hidden_list = [32, 32]
    out_dim = 3
    params = init_params(key, hidden_list, out_dim)

    # Test 1: small batch, single tile.
    key, kx = jax.random.split(key)
    x1 = jax.random.normal(kx, (2, 8, d_in), dtype=jnp.float32)
    y1 = fourier_mlp(x1, params)
    jax.block_until_ready(y1)
    assert y1.shape == (2, 8, out_dim)
    assert jnp.allclose(y1, _reference(x1, params), atol=5e-5, rtol=5e-5)

    # Test 2: non-multiple-of-128 token count -> exercises padding + multi-tile grid.
    key, kx = jax.random.split(key)
    x2 = jax.random.normal(kx, (3, 70, d_in), dtype=jnp.float32)
    y2 = fourier_mlp(x2, params)
    jax.block_until_ready(y2)
    assert y2.shape == (3, 70, out_dim)
    assert jnp.allclose(y2, _reference(x2, params), atol=5e-5, rtol=5e-5)

    print("KERNEL_OK")
</pallas_src>

<mosaic_0001>
module attributes {stable_mosaic.version = 11 : i64} {
  func.func @_fourier_mlp_kernel(%arg0: i32, %arg1: memref<22x128xf32, #tpu.memory_space<vmem>>, %arg2: memref<32x22xf32, #tpu.memory_space<vmem>>, %arg3: memref<32x22xf32, #tpu.memory_space<vmem>>, %arg4: memref<32x1xf32, #tpu.memory_space<vmem>>, %arg5: memref<32x32xf32, #tpu.memory_space<vmem>>, %arg6: memref<32x1xf32, #tpu.memory_space<vmem>>, %arg7: memref<3x32xf32, #tpu.memory_space<vmem>>, %arg8: memref<3x1xf32, #tpu.memory_space<vmem>>, %arg9: memref<3x128xf32, #tpu.memory_space<vmem>>) attributes {dimension_semantics = [#tpu.dimension_semantics<parallel>], iteration_bounds = array<i64: 1>, scalar_prefetch = 0 : i64, scratch_operands = 0 : i64, tpu.core_type = #tpu.core_type<tc>, window_params = [{transform_indices = @transform_0, window_bounds = array<i64: 22, 128>}, {pipeline_mode = #tpu.pipeline_mode<synchronous>, transform_indices = @transform_1, window_bounds = array<i64: 32, 22>}, {pipeline_mode = #tpu.pipeline_mode<synchronous>, transform_indices = @transform_2, window_bounds = array<i64: 32, 22>}, {pipeline_mode = #tpu.pipeline_mode<synchronous>, transform_indices = @transform_3, window_bounds = array<i64: 32, 1>}, {pipeline_mode = #tpu.pipeline_mode<synchronous>, transform_indices = @transform_4, window_bounds = array<i64: 32, 32>}, {pipeline_mode = #tpu.pipeline_mode<synchronous>, transform_indices = @transform_5, window_bounds = array<i64: 32, 1>}, {pipeline_mode = #tpu.pipeline_mode<synchronous>, transform_indices = @transform_6, window_bounds = array<i64: 3, 32>}, {pipeline_mode = #tpu.pipeline_mode<synchronous>, transform_indices = @transform_7, window_bounds = array<i64: 3, 1>}, {transform_indices = @transform_8, window_bounds = array<i64: 3, 128>}]} {
    %c0 = arith.constant 0 : index
    %c0_0 = arith.constant 0 : index
    %0 = vector.load %arg1[%c0, %c0_0] : memref<22x128xf32, #tpu.memory_space<vmem>>, vector<22x128xf32>
    %cst = arith.constant 5.000000e-01 : f32
    %1 = vector.broadcast %cst : f32 to vector<22x128xf32>
    %2 = arith.addf %0, %1 : vector<22x128xf32>
    %3 = math.floor %2 : vector<22x128xf32>
    %4 = arith.subf %0, %3 : vector<22x128xf32>
    %cst_1 = arith.constant 2.000000e+00 : f32
    %5 = vector.broadcast %cst_1 : f32 to vector<22x128xf32>
    %6 = arith.mulf %5, %4 : vector<22x128xf32>
    %cst_2 = arith.constant 5.000000e-01 : f32
    %7 = vector.broadcast %cst_2 : f32 to vector<22x128xf32>
    %8 = arith.addf %6, %7 : vector<22x128xf32>
    %9 = math.floor %8 : vector<22x128xf32>
    %cst_3 = arith.constant 5.000000e-01 : f32
    %10 = vector.broadcast %cst_3 : f32 to vector<22x128xf32>
    %11 = arith.mulf %10, %9 : vector<22x128xf32>
    %12 = arith.subf %4, %11 : vector<22x128xf32>
    %13 = math.absf %9 : vector<22x128xf32>
    %cst_4 = arith.constant 2.000000e+00 : f32
    %14 = vector.broadcast %cst_4 : f32 to vector<22x128xf32>
    %15 = arith.mulf %14, %13 : vector<22x128xf32>
    %cst_5 = arith.constant 1.000000e+00 : f32
    %16 = vector.broadcast %cst_5 : f32 to vector<22x128xf32>
    %17 = arith.subf %16, %15 : vector<22x128xf32>
    %cst_6 = arith.constant 6.28318548 : f32
    %18 = vector.broadcast %cst_6 : f32 to vector<22x128xf32>
    %19 = arith.mulf %18, %12 : vector<22x128xf32>
    %20 = arith.mulf %19, %19 : vector<22x128xf32>
    %cst_7 = arith.constant -2.50521079E-8 : f32
    %21 = vector.broadcast %cst_7 : f32 to vector<22x128xf32>
    %22 = arith.mulf %21, %20 : vector<22x128xf32>
    %cst_8 = arith.constant 2.75573188E-6 : f32
    %23 = vector.broadcast %cst_8 : f32 to vector<22x128xf32>
    %24 = arith.addf %22, %23 : vector<22x128xf32>
    %25 = arith.mulf %24, %20 : vector<22x128xf32>
    %cst_9 = arith.constant 1.98412701E-4 : f32
    %26 = vector.broadcast %cst_9 : f32 to vector<22x128xf32>
    %27 = arith.subf %25, %26 : vector<22x128xf32>
    %28 = arith.mulf %27, %20 : vector<22x128xf32>
    %cst_10 = arith.constant 0.00833333377 : f32
    %29 = vector.broadcast %cst_10 : f32 to vector<22x128xf32>
    %30 = arith.addf %28, %29 : vector<22x128xf32>
    %31 = arith.mulf %30, %20 : vector<22x128xf32>
    %cst_11 = arith.constant 0.166666672 : f32
    %32 = vector.broadcast %cst_11 : f32 to vector<22x128xf32>
    %33 = arith.subf %31, %32 : vector<22x128xf32>
    %34 = arith.mulf %19, %20 : vector<22x128xf32>
    %35 = arith.mulf %34, %33 : vector<22x128xf32>
    %36 = arith.addf %19, %35 : vector<22x128xf32>
    %cst_12 = arith.constant 2.08767559E-9 : f32
    %37 = vector.broadcast %cst_12 : f32 to vector<22x128xf32>
    %38 = arith.mulf %37, %20 : vector<22x128xf32>
    %cst_13 = arith.constant 2.755732E-7 : f32
    %39 = vector.broadcast %cst_13 : f32 to vector<22x128xf32>
    %40 = arith.subf %38, %39 : vector<22x128xf32>
    %41 = arith.mulf %40, %20 : vector<22x128xf32>
    %cst_14 = arith.constant 2.48015876E-5 : f32
    %42 = vector.broadcast %cst_14 : f32 to vector<22x128xf32>
    %43 = arith.addf %41, %42 : vector<22x128xf32>
    %44 = arith.mulf %43, %20 : vector<22x128xf32>
    %cst_15 = arith.constant 0.00138888892 : f32
    %45 = vector.broadcast %cst_15 : f32 to vector<22x128xf32>
    %46 = arith.subf %44, %45 : vector<22x128xf32>
    %47 = arith.mulf %46, %20 : vector<22x128xf32>
    %cst_16 = arith.constant 0.0416666679 : f32
    %48 = vector.broadcast %cst_16 : f32 to vector<22x128xf32>
    %49 = arith.addf %47, %48 : vector<22x128xf32>
    %50 = arith.mulf %49, %20 : vector<22x128xf32>
    %cst_17 = arith.constant 5.000000e-01 : f32
    %51 = vector.broadcast %cst_17 : f32 to vector<22x128xf32>
    %52 = arith.subf %50, %51 : vector<22x128xf32>
    %53 = arith.mulf %20, %52 : vector<22x128xf32>
    %cst_18 = arith.constant 1.000000e+00 : f32
    %54 = vector.broadcast %cst_18 : f32 to vector<22x128xf32>
    %55 = arith.addf %54, %53 : vector<22x128xf32>
    %56 = arith.mulf %17, %36 : vector<22x128xf32>
    %57 = arith.mulf %17, %55 : vector<22x128xf32>
    %c0_19 = arith.constant 0 : index
    %c0_20 = arith.constant 0 : index
    %58 = vector.load %arg2[%c0_19, %c0_20] : memref<32x22xf32, #tpu.memory_space<vmem>>, vector<32x22xf32>
    %cst_21 = arith.constant dense<0.000000e+00> : vector<32x128xf32>
    %59 = tpu.matmul %58, %56, %cst_21 {dimension_numbers = #tpu.dot_dimension_numbers<[1], [0], [0], [1], [0, 0, 1, 1], [], []>} : vector<32x22xf32>, vector<22x128xf32>, vector<32x128xf32> -> vector<32x128xf32>
    %c0_22 = arith.constant 0 : index
    %c0_23 = arith.constant 0 : index
    %60 = vector.load %arg3[%c0_22, %c0_23] : memref<32x22xf32, #tpu.memory_space<vmem>>, vector<32x22xf32>
    %cst_24 = arith.constant dense<0.000000e+00> : vector<32x128xf32>
    %61 = tpu.matmul %60, %57, %cst_24 {dimension_numbers = #tpu.dot_dimension_numbers<[1], [0], [0], [1], [0, 0, 1, 1], [], []>} : vector<32x22xf32>, vector<22x128xf32>, vector<32x128xf32> -> vector<32x128xf32>
    %62 = arith.addf %59, %61 : vector<32x128xf32>
    %c0_25 = arith.constant 0 : index
    %c0_26 = arith.constant 0 : index
    %63 = vector.load %arg4[%c0_25, %c0_26] : memref<32x1xf32, #tpu.memory_space<vmem>>, vector<32x1xf32>
    %64 = vector.broadcast %63 : vector<32x1xf32> to vector<32x128xf32>
    %65 = arith.addf %62, %64 : vector<32x128xf32>
    %cst_27 = arith.constant 0.00999999977 : f32
    %66 = vector.broadcast %cst_27 : f32 to vector<32x128xf32>
    %67 = arith.mulf %66, %65 : vector<32x128xf32>
    %68 = arith.maximumf %65, %67 : vector<32x128xf32>
    %c0_28 = arith.constant 0 : index
    %c0_29 = arith.constant 0 : index
    %69 = vector.load %arg5[%c0_28, %c0_29] : memref<32x32xf32, #tpu.memory_space<vmem>>, vector<32x32xf32>
    %c0_30 = arith.constant 0 : index
    %c0_31 = arith.constant 0 : index
    %70 = vector.load %arg6[%c0_30, %c0_31] : memref<32x1xf32, #tpu.memory_space<vmem>>, vector<32x1xf32>
    %cst_32 = arith.constant dense<0.000000e+00> : vector<32x128xf32>
    %71 = tpu.matmul %69, %68, %cst_32 {dimension_numbers = #tpu.dot_dimension_numbers<[1], [0], [0], [1], [0, 0, 1, 1], [], []>} : vector<32x32xf32>, vector<32x128xf32>, vector<32x128xf32> -> vector<32x128xf32>
    %72 = vector.broadcast %70 : vector<32x1xf32> to vector<32x128xf32>
    %73 = arith.addf %71, %72 : vector<32x128xf32>
    %cst_33 = arith.constant 0.00999999977 : f32
    %74 = vector.broadcast %cst_33 : f32 to vector<32x128xf32>
    %75 = arith.mulf %74, %73 : vector<32x128xf32>
    %76 = arith.maximumf %73, %75 : vector<32x128xf32>
    %c0_34 = arith.constant 0 : index
    %c0_35 = arith.constant 0 : index
    %77 = vector.load %arg7[%c0_34, %c0_35] : memref<3x32xf32, #tpu.memory_space<vmem>>, vector<3x32xf32>
    %c0_36 = arith.constant 0 : index
    %c0_37 = arith.constant 0 : index
    %78 = vector.load %arg8[%c0_36, %c0_37] : memref<3x1xf32, #tpu.memory_space<vmem>>, vector<3x1xf32>
    %cst_38 = arith.constant dense<0.000000e+00> : vector<3x128xf32>
    %79 = tpu.matmul %77, %76, %cst_38 {dimension_numbers = #tpu.dot_dimension_numbers<[1], [0], [0], [1], [0, 0, 1, 1], [], []>} : vector<3x32xf32>, vector<32x128xf32>, vector<3x128xf32> -> vector<3x128xf32>
    %80 = vector.broadcast %78 : vector<3x1xf32> to vector<3x128xf32>
    %81 = arith.addf %79, %80 : vector<3x128xf32>
    %c0_39 = arith.constant 0 : index
    %c0_40 = arith.constant 0 : index
    %82 = vector.load %arg9[%c0_39, %c0_40] : memref<3x128xf32, #tpu.memory_space<vmem>>, vector<3x128xf32>
    tpu.vector_store %arg9[%c0_39, %c0_40], %81 {strides = array<i32>} : memref<3x128xf32, #tpu.memory_space<vmem>>, vector<3x128xf32>,
    return
  }
  func.func @transform_0(%arg0: i32) -> (i32, i32) {
    %c0_i32 = arith.constant 0 : i32
    %c0_i32_0 = arith.constant 0 : i32
    return %c0_i32, %arg0 : i32, i32
  }
  func.func @transform_1(%arg0: i32) -> (i32, i32) {
    %c0_i32 = arith.constant 0 : i32
    %c0_i32_0 = arith.constant 0 : i32
    %c0_i32_1 = arith.constant 0 : i32
    return %c0_i32, %c0_i32_0 : i32, i32
  }
  func.func @transform_2(%arg0: i32) -> (i32, i32) {
    %c0_i32 = arith.constant 0 : i32
    %c0_i32_0 = arith.constant 0 : i32
    %c0_i32_1 = arith.constant 0 : i32
    return %c0_i32, %c0_i32_0 : i32, i32
  }
  func.func @transform_3(%arg0: i32) -> (i32, i32) {
    %c0_i32 = arith.constant 0 : i32
    %c0_i32_0 = arith.constant 0 : i32
    %c0_i32_1 = arith.constant 0 : i32
    return %c0_i32, %c0_i32_0 : i32, i32
  }
  func.func @transform_4(%arg0: i32) -> (i32, i32) {
    %c0_i32 = arith.constant 0 : i32
    %c0_i32_0 = arith.constant 0 : i32
    %c0_i32_1 = arith.constant 0 : i32
    return %c0_i32, %c0_i32_0 : i32, i32
  }
  func.func @transform_5(%arg0: i32) -> (i32, i32) {
    %c0_i32 = arith.constant 0 : i32
    %c0_i32_0 = arith.constant 0 : i32
    %c0_i32_1 = arith.constant 0 : i32
    return %c0_i32, %c0_i32_0 : i32, i32
  }
  func.func @transform_6(%arg0: i32) -> (i32, i32) {
    %c0_i32 = arith.constant 0 : i32
    %c0_i32_0 = arith.constant 0 : i32
    %c0_i32_1 = arith.constant 0 : i32
    return %c0_i32, %c0_i32_0 : i32, i32
  }
  func.func @transform_7(%arg0: i32) -> (i32, i32) {
    %c0_i32 = arith.constant 0 : i32
    %c0_i32_0 = arith.constant 0 : i32
    %c0_i32_1 = arith.constant 0 : i32
    return %c0_i32, %c0_i32_0 : i32, i32
  }
  func.func @transform_8(%arg0: i32) -> (i32, i32) {
    %c0_i32 = arith.constant 0 : i32
    %c0_i32_0 = arith.constant 0 : i32
    return %c0_i32, %arg0 : i32, i32
  }
}

</mosaic_0001>

<llo_original>
// kernel: tpu_custom_call.1
$region0: #{tpu_custom_call.1}
  #allocation0 [shape = 'u32[]', space=smem, size = 0x4, offset = 0x4, fixed_abs, tag = 'smem constant byte address 0x4 - core index']
  #allocation1 [shape = 'u32[144,128]{1,0:T(1,128)}', space=vmem, size = 0x12000, scoped, tag = 'internal scratch']
  %s0 = inlined_call_operand.vmem [shape: f32[22,128], index: 0, kind: input, shape index: {}]
  %s1 = inlined_call_operand.vmem [shape: f32[32,22], index: 1, kind: input, shape index: {}]
  %s2 = inlined_call_operand.vmem [shape: f32[32,22], index: 2, kind: input, shape index: {}]
  %s3 = inlined_call_operand.vmem [shape: f32[32,1], index: 3, kind: input, shape index: {}]
  %s4 = inlined_call_operand.vmem [shape: f32[32,32], index: 4, kind: input, shape index: {}]
  %s5 = inlined_call_operand.vmem [shape: f32[32,1], index: 5, kind: input, shape index: {}]
  %s6 = inlined_call_operand.vmem [shape: f32[3,32], index: 6, kind: input, shape index: {}]
  %s7 = inlined_call_operand.vmem [shape: f32[3,1], index: 7, kind: input, shape index: {}]
  %s8 = inlined_call_operand.hbm [shape: f32[3,128], index: 8, kind: output, shape index: {}]
  %s9 = sld [smem:[#allocation0]]
  $region42: #{tpu_custom_call.1} parent=0
    _
  %s11 = ssub.s32 1, %s9
  %s12 = scalar_select 0, %s11, %s9
  $region1: #{tpu_custom_call.1} parent=0
    #allocation2 [shape = 'u8[2048]{0}', space=vmem, size = 0x800, scoped, tag = 'output window, operand 0, single buffered']
    #allocation3 [shape = 's32[1]{0}', space=sflag, size = 0x4, scoped, tag = 'scoped memory for tpu_custom_call.1']
    %13 = vsyncpa [#allocation3], 0
    // Predicated region
    $region2: #{tpu_custom_call.1} parent=1 // pred_check
      _
    $region3: #{tpu_custom_call.1} parent=1 // pred_check_branch
      %15 = sbr.rel (0) target = $region5
    $region4: #{tpu_custom_call.1} parent=1 // pred_region
      _
    $region5: #{tpu_custom_call.1} parent=1 // pred_fallthru
      _
    // Predicated region
    $region6: #{tpu_custom_call.1} parent=1 // pred_check
      _
    $region7: #{tpu_custom_call.1} parent=1 // pred_check_branch
      %17 = sbr.rel (0) target = $region9
    $region8: #{tpu_custom_call.1} parent=1 // pred_region
      _
    $region9: #{tpu_custom_call.1} parent=1 // pred_fallthru
      _
    // Predicated region
    $region10: #{tpu_custom_call.1} parent=1 // pred_check
      _
    $region11: #{tpu_custom_call.1} parent=1 // pred_check_branch
      %19 = sbr.rel (0) target = $region13
    $region12: #{tpu_custom_call.1} parent=1 // pred_region
      _
    $region13: #{tpu_custom_call.1} parent=1 // pred_fallthru
      _
    // Predicated region
    $region14: #{tpu_custom_call.1} parent=1 // pred_check
      _
    $region15: #{tpu_custom_call.1} parent=1 // pred_check_branch
      %21 = sbr.rel (0) target = $region17
    $region16: #{tpu_custom_call.1} parent=1 // pred_region
      _
    $region17: #{tpu_custom_call.1} parent=1 // pred_fallthru
      _
    // Predicated region
    $region18: #{tpu_custom_call.1} parent=1 // pred_check
      _
    $region19: #{tpu_custom_call.1} parent=1 // pred_check_branch
      %23 = sbr.rel (0) target = $region21
    $region20: #{tpu_custom_call.1} parent=1 // pred_region
      _
    $region21: #{tpu_custom_call.1} parent=1 // pred_fallthru
      _
    // Predicated region
    $region22: #{tpu_custom_call.1} parent=1 // pred_check
      _
    $region23: #{tpu_custom_call.1} parent=1 // pred_check_branch
      %25 = sbr.rel (0) target = $region25
    $region24: #{tpu_custom_call.1} parent=1 // pred_region
      _
    $region25: #{tpu_custom_call.1} parent=1 // pred_fallthru
      _
    // Predicated region
    $region26: #{tpu_custom_call.1} parent=1 // pred_check
      _
    $region27: #{tpu_custom_call.1} parent=1 // pred_check_branch
      %27 = sbr.rel (0) target = $region29
    $region28: #{tpu_custom_call.1} parent=1 // pred_region
      _
    $region29: #{tpu_custom_call.1} parent=1 // pred_fallthru
      _
    // Predicated region
    $region30: #{tpu_custom_call.1} parent=1 // pred_check
      _
    $region31: #{tpu_custom_call.1} parent=1 // pred_check_branch
      %29 = sbr.rel (0) target = $region33
    $region32: #{tpu_custom_call.1} parent=1 // pred_region
      _
    $region33: #{tpu_custom_call.1} parent=1 // pred_fallthru
      _
    %v30 = vld [vmem:[%s0] sm:$0xff]
    %v31 = vld [vmem:[%s0 + $0x8] sm:$0xff]
    %v32 = vld [vmem:[%s0 + $0x10] sm:$0x3f]
    %v33 = vadd.f32 %v30, 0.5
    %v34 = vadd.f32 %v31, 0.5
    %v35 = vadd.f32 %v32, 0.5
    %v36 = vfloor.f32 %v33
    %v37 = vfloor.f32 %v34
    %v38 = vfloor.f32 %v35
    %v39 = vsub.f32 %v30, %v36
    %v40 = vsub.f32 %v31, %v37
    %v41 = vsub.f32 %v32, %v38
    %v42 = vmul.f32 %v39, 2.0
    %v43 = vmul.f32 %v40, 2.0
    %v44 = vmul.f32 %v41, 2.0
    %v45 = vadd.f32 %v42, 0.5
    %v46 = vadd.f32 %v43, 0.5
    %v47 = vadd.f32 %v44, 0.5
    %v48 = vfloor.f32 %v45
    %v49 = vfloor.f32 %v46
    %v50 = vfloor.f32 %v47
    %v51 = vmul.f32 %v48, 0.5
    %v52 = vmul.f32 %v49, 0.5
    %v53 = vmul.f32 %v50, 0.5
    %v54 = vsub.f32 %v39, %v51
    %v55 = vsub.f32 %v40, %v52
    %v56 = vsub.f32 %v41, %v53
    %v57 = vand.u32 2147483647, %v48
    %v58 = vand.u32 2147483647, %v49
    %v59 = vand.u32 2147483647, %v50
    %v60 = vmul.f32 %v57, 2.0
    %v61 = vmul.f32 %v58, 2.0
    %v62 = vmul.f32 %v59, 2.0
    %v63 = vsub.f32 1.0, %v60
    %v64 = vsub.f32 1.0, %v61
    %v65 = vsub.f32 1.0, %v62
    %v66 = vmul.f32 %v54, 6.2831855
    %v67 = vmul.f32 %v55, 6.2831855
    %v68 = vmul.f32 %v56, 6.2831855
    %v69 = vmul.f32 %v66, %v66
    %v70 = vmul.f32 %v67, %v67
    %v71 = vmul.f32 %v68, %v68
    %v72 = vmul.f32 %v69, -2.5052108e-08
    %v73 = vmul.f32 %v70, -2.5052108e-08
    %v74 = vmul.f32 %v71, -2.5052108e-08
    %v75 = vadd.f32 %v72, 2.7557319e-06
    %v76 = vadd.f32 %v73, 2.7557319e-06
    %v77 = vadd.f32 %v74, 2.7557319e-06
    %v78 = vmul.f32 %v75, %v69
    %v79 = vmul.f32 %v76, %v70
    %v80 = vmul.f32 %v77, %v71
    %v81 = vsub.f32 %v78, 0.0001984127
    %v82 = vsub.f32 %v79, 0.0001984127
    %v83 = vsub.f32 %v80, 0.0001984127
    %v84 = vmul.f32 %v81, %v69
    %v85 = vmul.f32 %v82, %v70
    %v86 = vmul.f32 %v83, %v71
    %v87 = vadd.f32 %v84, 0.008333334
    %v88 = vadd.f32 %v85, 0.008333334
    %v89 = vadd.f32 %v86, 0.008333334
    %v90 = vmul.f32 %v87, %v69
    %v91 = vmul.f32 %v88, %v70
    %v92 = vmul.f32 %v89, %v71
    %v93 = vsub.f32 %v90, 0.16666667
    %v94 = vsub.f32 %v91, 0.16666667
    %v95 = vsub.f32 %v92, 0.16666667
    %v96 = vmul.f32 %v66, %v69
    %v97 = vmul.f32 %v67, %v70
    %v98 = vmul.f32 %v68, %v71
    %v99 = vmul.f32 %v96, %v93
    %v100 = vmul.f32 %v97, %v94
    %v101 = vmul.f32 %v98, %v95
    %v102 = vadd.f32 %v66, %v99
    %v103 = vadd.f32 %v67, %v100
    %v104 = vadd.f32 %v68, %v101
    %v105 = vmul.f32 %v69, 2.0876756e-09
    %v106 = vmul.f32 %v70, 2.0876756e-09
    %v107 = vmul.f32 %v71, 2.0876756e-09
    %v108 = vsub.f32 %v105, 2.755732e-07
    %v109 = vsub.f32 %v106, 2.755732e-07
    %v110 = vsub.f32 %v107, 2.755732e-07
    %v111 = vmul.f32 %v108, %v69
    %v112 = vmul.f32 %v109, %v70
    %v113 = vmul.f32 %v110, %v71
    %v114 = vadd.f32 %v111, 2.4801588e-05
    %v115 = vadd.f32 %v112, 2.4801588e-05
    %v116 = vadd.f32 %v113, 2.4801588e-05
    %v117 = vmul.f32 %v114, %v69
    %v118 = vmul.f32 %v115, %v70
    %v119 = vmul.f32 %v116, %v71
    %v120 = vsub.f32 %v117, 0.0013888889
    %v121 = vsub.f32 %v118, 0.0013888889
    %v122 = vsub.f32 %v119, 0.0013888889
    %v123 = vmul.f32 %v120, %v69
    %v124 = vmul.f32 %v121, %v70
    %v125 = vmul.f32 %v122, %v71
    %v126 = vadd.f32 %v123, 0.041666668
    %v127 = vadd.f32 %v124, 0.041666668
    %v128 = vadd.f32 %v125, 0.041666668
    %v129 = vmul.f32 %v126, %v69
    %v130 = vmul.f32 %v127, %v70
    %v131 = vmul.f32 %v128, %v71
    %v132 = vsub.f32 %v129, 0.5
    %v133 = vsub.f32 %v130, 0.5
    %v134 = vsub.f32 %v131, 0.5
    %v135 = vmul.f32 %v69, %v132
    %v136 = vmul.f32 %v70, %v133
    %v137 = vmul.f32 %v71, %v134
    %v138 = vadd.f32 %v135, 1.0
    %v139 = vadd.f32 %v136, 1.0
    %v140 = vadd.f32 %v137, 1.0
    %v141 = vmul.f32 %v63, %v102
    %v142 = vmul.f32 %v64, %v103
    %v143 = vmul.f32 %v65, %v104
    %v144 = vmul.f32 %v63, %v138
    %v145 = vmul.f32 %v64, %v139
    %v146 = vmul.f32 %v65, %v140
    %v147 = vld [vmem:[%s1] sm:$0xff]
    %v148 = vld [vmem:[%s1 + $0x8] sm:$0xff]
    %v149 = vld [vmem:[%s1 + $0x10] sm:$0xff]
    %v150 = vld [vmem:[%s1 + $0x18] sm:$0xff]
    %v151 = vld [vmem:[%s2] sm:$0xff]
    %v152 = vld [vmem:[%s2 + $0x8] sm:$0xff]
    %v153 = vld [vmem:[%s2 + $0x10] sm:$0xff]
    %v154 = vld [vmem:[%s2 + $0x18] sm:$0xff]
    %vm155 = vcmask 179200
    %v157 = vsel %vm155, %v151, 0
    %v160 = vsel %vm155, %v152, 0
    %v163 = vsel %vm155, %v153, 0
    %v166 = vsel %vm155, %v154, 0
    %vm168 = vcmask 1045504
    %v170 = vsel %vm168, %v146, 0
    %172 = vmatprep.subr.mxu0 0.0
    %173 = vmatpush1.msra.mxu0 0.0
    %174 = vmatprep.subr.mxu0 0.0
    %175 = vmatpush1.msra.mxu0 0.0
    %176 = vmatprep.subr.mxu0 0.0
    %177 = vmatpush1.msra.mxu0 0.0
    %178 = vmatprep.subr.mxu0 0.0
    %179 = vmatpush1.msra.mxu0 0.0
    %180 = vmatprep.subr.mxu0 0.0
    %181 = vmatpush1.msra.mxu0 0.0
    %182 = vmatprep.subr.mxu0 0.0
    %183 = vmatpush1.msra.mxu0 0.0
    %184 = vmatprep.subr.mxu0 0.0
    %185 = vmatpush1.msra.mxu0 0.0
    %186 = vmatprep.subr.mxu0 0.0
    %187 = vmatpush1.msra.mxu0 0.0
    %188 = vmatprep.subr.mxu0 0.0
    %189 = vmatpush1.msra.mxu0 0.0
    %190 = vmatprep.subr.mxu0 0.0
    %191 = vmatpush1.msra.mxu0 0.0
    %192 = vmatprep.subr.mxu0 0.0
    %193 = vmatpush1.msra.mxu0 0.0
    %194 = vmatprep.subr.mxu0 0.0
    %195 = vmatpush1.msra.mxu0 0.0
    %196 = vmatprep.subr.mxu0 0.0
    %197 = vmatpush1.msra.mxu0 0.0
    %198 = vmatprep.subr.mxu0 0.0
    %199 = vmatpush1.msra.mxu0 %v170
    %200 = vmatprep.subr.mxu0 0.0
    %201 = vmatpush1.msra.mxu0 %v145
    %202 = vmatprep.subr.mxu0 0.0
    %203 = vmatpush1.msra.mxu0 %v144
    %204 = vmatprep.subr.mxu0 0.0
    %205 = vmatpush2.msra.mxu0 0.0
    %206 = vmatprep.subr.mxu0 0.0
    %207 = vmatpush2.msra.mxu0 0.0
    %208 = vmatprep.subr.mxu0 0.0
    %209 = vmatpush2.msra.mxu0 0.0
    %210 = vmatprep.subr.mxu0 0.0
    %211 = vmatpush2.msra.mxu0 0.0
    %212 = vmatprep.subr.mxu0 0.0
    %213 = vmatpush2.msra.mxu0 0.0
    %214 = vmatprep.subr.mxu0 0.0
    %215 = vmatpush2.msra.mxu0 0.0
    %216 = vmatprep.subr.mxu0 0.0
    %217 = vmatpush2.msra.mxu0 0.0
    %218 = vmatprep.subr.mxu0 0.0
    %219 = vmatpush2.msra.mxu0 0.0
    %220 = vmatprep.subr.mxu0 0.0
    %221 = vmatpush2.msra.mxu0 0.0
    %222 = vmatprep.subr.mxu0 0.0
    %223 = vmatpush2.msra.mxu0 0.0
    %224 = vmatprep.subr.mxu0 0.0
    %225 = vmatpush2.msra.mxu0 0.0
    %226 = vmatprep.subr.mxu0 0.0
    %227 = vmatpush2.msra.mxu0 0.0
    %228 = vmatprep.subr.mxu0 0.0
    %229 = vmatpush2.msra.mxu0 0.0
    %230 = vmatprep.subr.mxu0 0.0
    %231 = vmatpush2.msra.mxu0 0.0
    %232 = vmatprep.subr.mxu0 0.0
    %233 = vmatpush2.msra.mxu0 0.0
    %234 = vmatprep.subr.mxu0 0.0
    %235 = vmatpush2.msra.mxu0 0.0
    %236 = vmatprep.mubr.f32.mxu0 0.0
    %237 = vmatmul.mubr.f32.gmra.mxu0 %v157
    %v238 = vpop.f32.mrf.mxu0
    %v239 = vadd.f32 0.0, %v238
    %v240 = vpop.f32.mrf.mxu0
    %241 = vmatprep.mubr.f32.mxu0 0.0
    %242 = vmatmul.mubr.f32.gmra.mxu0 %v160
    %v243 = vpop.f32.mrf.mxu0
    %v244 = vadd.f32 0.0, %v243
    %v245 = vpop.f32.mrf.mxu0
    %246 = vmatprep.mubr.f32.mxu0 0.0
    %247 = vmatmul.mubr.f32.gmra.mxu0 %v163
    %v248 = vpop.f32.mrf.mxu0
    %v249 = vadd.f32 0.0, %v248
    %v250 = vpop.f32.mrf.mxu0
    %251 = vmatprep.mubr.f32.mxu0 0.0
    %252 = vmatmul.mubr.f32.gmra.mxu0 %v166
    %v253 = vpop.f32.mrf.mxu0
    %v254 = vadd.f32 0.0, %v253
    %v255 = vpop.f32.mrf.mxu0
    %256 = vdwg.mxu0
    %v258 = vsel %vm155, %v147, 0
    %v261 = vsel %vm155, %v148, 0
    %v264 = vsel %vm155, %v149, 0
    %v267 = vsel %vm155, %v150, 0
    %v270 = vsel %vm168, %v143, 0
    %272 = vmatprep.subr.mxu0 0.0
    %273 = vmatpush1.msra.mxu0 0.0
    %274 = vmatprep.subr.mxu0 0.0
    %275 = vmatpush1.msra.mxu0 0.0
    %276 = vmatprep.subr.mxu0 0.0
    %277 = vmatpush1.msra.mxu0 0.0
    %278 = vmatprep.subr.mxu0 0.0
    %279 = vmatpush1.msra.mxu0 0.0
    %280 = vmatprep.subr.mxu0 0.0
    %281 = vmatpush1.msra.mxu0 0.0
    %282 = vmatprep.subr.mxu0 0.0
    %283 = vmatpush1.msra.mxu0 0.0
    %284 = vmatprep.subr.mxu0 0.0
    %285 = vmatpush1.msra.mxu0 0.0
    %286 = vmatprep.subr.mxu0 0.0
    %287 = vmatpush1.msra.mxu0 0.0
    %288 = vmatprep.subr.mxu0 0.0
    %289 = vmatpush1.msra.mxu0 0.0
    %290 = vmatprep.subr.mxu0 0.0
    %291 = vmatpush1.msra.mxu0 0.0
    %292 = vmatprep.subr.mxu0 0.0
    %293 = vmatpush1.msra.mxu0 0.0
    %294 = vmatprep.subr.mxu0 0.0
    %295 = vmatpush1.msra.mxu0 0.0
    %296 = vmatprep.subr.mxu0 0.0
    %297 = vmatpush1.msra.mxu0 0.0
    %298 = vmatprep.subr.mxu0 0.0
    %299 = vmatpush1.msra.mxu0 %v270
    %300 = vmatprep.subr.mxu0 0.0
    %301 = vmatpush1.msra.mxu0 %v142
    %302 = vmatprep.subr.mxu0 0.0
    %303 = vmatpush1.msra.mxu0 %v141
    %304 = vmatprep.subr.mxu0 0.0
    %305 = vmatpush2.msra.mxu0 0.0
    %306 = vmatprep.subr.mxu0 0.0
    %307 = vmatpush2.msra.mxu0 0.0
    %308 = vmatprep.subr.mxu0 0.0
    %309 = vmatpush2.msra.mxu0 0.0
    %310 = vmatprep.subr.mxu0 0.0
    %311 = vmatpush2.msra.mxu0 0.0
    %312 = vmatprep.subr.mxu0 0.0
    %313 = vmatpush2.msra.mxu0 0.0
    %314 = vmatprep.subr.mxu0 0.0
    %315 = vmatpush2.msra.mxu0 0.0
    %316 = vmatprep.subr.mxu0 0.0
    %317 = vmatpush2.msra.mxu0 0.0
    %318 = vmatprep.subr.mxu0 0.0
    %319 = vmatpush2.msra.mxu0 0.0
    %320 = vmatprep.subr.mxu0 0.0
    %321 = vmatpush2.msra.mxu0 0.0
    %322 = vmatprep.subr.mxu0 0.0
    %323 = vmatpush2.msra.mxu0 0.0
    %324 = vmatprep.subr.mxu0 0.0
    %325 = vmatpush2.msra.mxu0 0.0
    %326 = vmatprep.subr.mxu0 0.0
    %327 = vmatpush2.msra.mxu0 0.0
    %328 = vmatprep.subr.mxu0 0.0
    %329 = vmatpush2.msra.mxu0 0.0
    %330 = vmatprep.subr.mxu0 0.0
    %331 = vmatpush2.msra.mxu0 0.0
    %332 = vmatprep.subr.mxu0 0.0
    %333 = vmatpush2.msra.mxu0 0.0
    %334 = vmatprep.subr.mxu0 0.0
    %335 = vmatpush2.msra.mxu0 0.0
    %336 = vmatprep.mubr.f32.mxu0 0.0
    %337 = vmatmul.mubr.f32.gmra.mxu0 %v258
    %v338 = vpop.f32.mrf.mxu0
    %v339 = vadd.f32 %v239, %v338
    %v340 = vpop.f32.mrf.mxu0
    %341 = vmatprep.mubr.f32.mxu0 0.0
    %342 = vmatmul.mubr.f32.gmra.mxu0 %v261
    %v343 = vpop.f32.mrf.mxu0
    %v344 = vadd.f32 %v244, %v343
    %v345 = vpop.f32.mrf.mxu0
    %346 = vmatprep.mubr.f32.mxu0 0.0
    %347 = vmatmul.mubr.f32.gmra.mxu0 %v264
    %v348 = vpop.f32.mrf.mxu0
    %v349 = vadd.f32 %v249, %v348
    %v350 = vpop.f32.mrf.mxu0
    %351 = vmatprep.mubr.f32.mxu0 0.0
    %352 = vmatmul.mubr.f32.gmra.mxu0 %v267
    %v353 = vpop.f32.mrf.mxu0
    %v354 = vadd.f32 %v254, %v353
    %v355 = vpop.f32.mrf.mxu0
    %356 = vdwg.mxu0
    %v357 = vld [vmem:[%s3] sm:$0xff]
    %v358 = vld [vmem:[%s3 + $0x8] sm:$0xff]
    %v359 = vld [vmem:[%s3 + $0x10] sm:$0xff]
    %v360 = vld [vmem:[%s3 + $0x18] sm:$0xff]
    %362 = vset.pattern.permute.xlu0 0
    %363 = vperm.xlu0 %362, %v357
    %v364 = vpop.permute.xlu0 %363
    %367 = vset.pattern.permute.xlu0 0
    %368 = vperm.xlu0 %367, %v358
    %v369 = vpop.permute.xlu0 %368
    %372 = vset.pattern.permute.xlu0 0
    %373 = vperm.xlu0 %372, %v359
    %v374 = vpop.permute.xlu0 %373
    %377 = vset.pattern.permute.xlu0 0
    %378 = vperm.xlu0 %377, %v360
    %v379 = vpop.permute.xlu0 %378
    %v381 = vadd.f32 %v339, %v364
    %v382 = vadd.f32 %v344, %v369
    %v383 = vadd.f32 %v349, %v374
    %v384 = vadd.f32 %v354, %v379
    %v385 = vmul.f32 %v381, 0.01
    %v386 = vmul.f32 %v382, 0.01
    %v387 = vmul.f32 %v383, 0.01
    %v388 = vmul.f32 %v384, 0.01
    %v389 = vmax.f32 %v381, %v385
    %v390 = vmax.f32 %v382, %v386
    %v391 = vmax.f32 %v383, %v387
    %v392 = vmax.f32 %v384, %v388
    %v393 = vld [vmem:[%s4] sm:$0xff]
    %v394 = vld [vmem:[%s4 + $0x8] sm:$0xff]
    %v395 = vld [vmem:[%s4 + $0x10] sm:$0xff]
    %v396 = vld [vmem:[%s4 + $0x18] sm:$0xff]
    %v397 = vld [vmem:[%s5] sm:$0xff]
    %v398 = vld [vmem:[%s5 + $0x8] sm:$0xff]
    %v399 = vld [vmem:[%s5 + $0x10] sm:$0xff]
    %v400 = vld [vmem:[%s5 + $0x18] sm:$0xff]
    %402 = vset.pattern.permute.xlu0 0
    %403 = vperm.xlu0 %402, %v397
    %v404 = vpop.permute.xlu0 %403
    %407 = vset.pattern.permute.xlu0 0
    %408 = vperm.xlu0 %407, %v398
    %v409 = vpop.permute.xlu0 %408
    %412 = vset.pattern.permute.xlu0 0
    %413 = vperm.xlu0 %412, %v399
    %v414 = vpop.permute.xlu0 %413
    %417 = vset.pattern.permute.xlu0 0
    %418 = vperm.xlu0 %417, %v400
    %v419 = vpop.permute.xlu0 %418
    %vm421 = vcmask 261120
    %v423 = vsel %vm421, %v393, 0
    %v426 = vsel %vm421, %v394, 0
    %v429 = vsel %vm421, %v395, 0
    %v432 = vsel %vm421, %v396, 0
    %434 = vmatprep.subr.mxu0 0.0
    %435 = vmatpush1.msra.mxu0 0.0
    %436 = vmatprep.subr.mxu0 0.0
    %437 = vmatpush1.msra.mxu0 0.0
    %438 = vmatprep.subr.mxu0 0.0
    %439 = vmatpush1.msra.mxu0 0.0
    %440 = vmatprep.subr.mxu0 0.0
    %441 = vmatpush1.msra.mxu0 0.0
    %442 = vmatprep.subr.mxu0 0.0
    %443 = vmatpush1.msra.mxu0 0.0
    %444 = vmatprep.subr.mxu0 0.0
    %445 = vmatpush1.msra.mxu0 0.0
    %446 = vmatprep.subr.mxu0 0.0
    %447 = vmatpush1.msra.mxu0 0.0
    %448 = vmatprep.subr.mxu0 0.0
    %449 = vmatpush1.msra.mxu0 0.0
    %450 = vmatprep.subr.mxu0 0.0
    %451 = vmatpush1.msra.mxu0 0.0
    %452 = vmatprep.subr.mxu0 0.0
    %453 = vmatpush1.msra.mxu0 0.0
    %454 = vmatprep.subr.mxu0 0.0
    %455 = vmatpush1.msra.mxu0 0.0
    %456 = vmatprep.subr.mxu0 0.0
    %457 = vmatpush1.msra.mxu0 0.0
    %458 = vmatprep.subr.mxu0 0.0
    %459 = vmatpush1.msra.mxu0 %v392
    %460 = vmatprep.subr.mxu0 0.0
    %461 = vmatpush1.msra.mxu0 %v391
    %462 = vmatprep.subr.mxu0 0.0
    %463 = vmatpush1.msra.mxu0 %v390
    %464 = vmatprep.subr.mxu0 0.0
    %465 = vmatpush1.msra.mxu0 %v389
    %466 = vmatprep.subr.mxu0 0.0
    %467 = vmatpush2.msra.mxu0 0.0
    %468 = vmatprep.subr.mxu0 0.0
    %469 = vmatpush2.msra.mxu0 0.0
    %470 = vmatprep.subr.mxu0 0.0
    %471 = vmatpush2.msra.mxu0 0.0
    %472 = vmatprep.subr.mxu0 0.0
    %473 = vmatpush2.msra.mxu0 0.0
    %474 = vmatprep.subr.mxu0 0.0
    %475 = vmatpush2.msra.mxu0 0.0
    %476 = vmatprep.subr.mxu0 0.0
    %477 = vmatpush2.msra.mxu0 0.0
    %478 = vmatprep.subr.mxu0 0.0
    %479 = vmatpush2.msra.mxu0 0.0
    %480 = vmatprep.subr.mxu0 0.0
    %481 = vmatpush2.msra.mxu0 0.0
    %482 = vmatprep.subr.mxu0 0.0
    %483 = vmatpush2.msra.mxu0 0.0
    %484 = vmatprep.subr.mxu0 0.0
    %485 = vmatpush2.msra.mxu0 0.0
    %486 = vmatprep.subr.mxu0 0.0
    %487 = vmatpush2.msra.mxu0 0.0
    %488 = vmatprep.subr.mxu0 0.0
    %489 = vmatpush2.msra.mxu0 0.0
    %490 = vmatprep.subr.mxu0 0.0
    %491 = vmatpush2.msra.mxu0 0.0
    %492 = vmatprep.subr.mxu0 0.0
    %493 = vmatpush2.msra.mxu0 0.0
    %494 = vmatprep.subr.mxu0 0.0
    %495 = vmatpush2.msra.mxu0 0.0
    %496 = vmatprep.subr.mxu0 0.0
    %497 = vmatpush2.msra.mxu0 0.0
    %498 = vmatprep.mubr.f32.mxu0 0.0
    %499 = vmatmul.mubr.f32.gmra.mxu0 %v423
    %v500 = vpop.f32.mrf.mxu0
    %v501 = vadd.f32 %v404, %v500
    %v502 = vpop.f32.mrf.mxu0
    %503 = vmatprep.mubr.f32.mxu0 0.0
    %504 = vmatmul.mubr.f32.gmra.mxu0 %v426
    %v505 = vpop.f32.mrf.mxu0
    %v506 = vadd.f32 %v409, %v505
    %v507 = vpop.f32.mrf.mxu0
    %508 = vmatprep.mubr.f32.mxu0 0.0
    %509 = vmatmul.mubr.f32.gmra.mxu0 %v429
    %v510 = vpop.f32.mrf.mxu0
    %v511 = vadd.f32 %v414, %v510
    %v512 = vpop.f32.mrf.mxu0
    %513 = vmatprep.mubr.f32.mxu0 0.0
    %514 = vmatmul.mubr.f32.gmra.mxu0 %v432
    %v515 = vpop.f32.mrf.mxu0
    %v516 = vadd.f32 %v419, %v515
    %v517 = vpop.f32.mrf.mxu0
    %518 = vdwg.mxu0
    %v519 = vmul.f32 %v501, 0.01
    %v520 = vmul.f32 %v506, 0.01
    %v521 = vmul.f32 %v511, 0.01
    %v522 = vmul.f32 %v516, 0.01
    %v523 = vmax.f32 %v501, %v519
    %v524 = vmax.f32 %v506, %v520
    %v525 = vmax.f32 %v511, %v521
    %v526 = vmax.f32 %v516, %v522
    %v527 = vld [vmem:[%s6] sm:$0x7]
    %v528 = vld [vmem:[%s7] sm:$0x7]
    %530 = vset.pattern.permute.xlu0 0
    %531 = vperm.xlu0 %530, %v528
    %v532 = vpop.permute.xlu0 %531
    %v535 = vsel %vm421, %v527, 0
    %537 = vmatprep.subr.mxu0 0.0
    %538 = vmatpush1.msra.mxu0 0.0
    %539 = vmatprep.subr.mxu0 0.0
    %540 = vmatpush1.msra.mxu0 0.0
    %541 = vmatprep.subr.mxu0 0.0
    %542 = vmatpush1.msra.mxu0 0.0
    %543 = vmatprep.subr.mxu0 0.0
    %544 = vmatpush1.msra.mxu0 0.0
    %545 = vmatprep.subr.mxu0 0.0
    %546 = vmatpush1.msra.mxu0 0.0
    %547 = vmatprep.subr.mxu0 0.0
    %548 = vmatpush1.msra.mxu0 0.0
    %549 = vmatprep.subr.mxu0 0.0
    %550 = vmatpush1.msra.mxu0 0.0
    %551 = vmatprep.subr.mxu0 0.0
    %552 = vmatpush1.msra.mxu0 0.0
    %553 = vmatprep.subr.mxu0 0.0
    %554 = vmatpush1.msra.mxu0 0.0
    %555 = vmatprep.subr.mxu0 0.0
    %556 = vmatpush1.msra.mxu0 0.0
    %557 = vmatprep.subr.mxu0 0.0
    %558 = vmatpush1.msra.mxu0 0.0
    %559 = vmatprep.subr.mxu0 0.0
    %560 = vmatpush1.msra.mxu0 0.0
    %561 = vmatprep.subr.mxu0 0.0
    %562 = vmatpush1.msra.mxu0 %v526
    %563 = vmatprep.subr.mxu0 0.0
    %564 = vmatpush1.msra.mxu0 %v525
    %565 = vmatprep.subr.mxu0 0.0
    %566 = vmatpush1.msra.mxu0 %v524
    %567 = vmatprep.subr.mxu0 0.0
    %568 = vmatpush1.msra.mxu0 %v523
    %569 = vmatprep.subr.mxu0 0.0
    %570 = vmatpush2.msra.mxu0 0.0
    %571 = vmatprep.subr.mxu0 0.0
    %572 = vmatpush2.msra.mxu0 0.0
    %573 = vmatprep.subr.mxu0 0.0
    %574 = vmatpush2.msra.mxu0 0.0
    %575 = vmatprep.subr.mxu0 0.0
    %576 = vmatpush2.msra.mxu0 0.0
    %577 = vmatprep.subr.mxu0 0.0
    %578 = vmatpush2.msra.mxu0 0.0
    %579 = vmatprep.subr.mxu0 0.0
    %580 = vmatpush2.msra.mxu0 0.0
    %581 = vmatprep.subr.mxu0 0.0
    %582 = vmatpush2.msra.mxu0 0.0
    %583 = vmatprep.subr.mxu0 0.0
    %584 = vmatpush2.msra.mxu0 0.0
    %585 = vmatprep.subr.mxu0 0.0
    %586 = vmatpush2.msra.mxu0 0.0
    %587 = vmatprep.subr.mxu0 0.0
    %588 = vmatpush2.msra.mxu0 0.0
    %589 = vmatprep.subr.mxu0 0.0
    %590 = vmatpush2.msra.mxu0 0.0
    %591 = vmatprep.subr.mxu0 0.0
    %592 = vmatpush2.msra.mxu0 0.0
    %593 = vmatprep.subr.mxu0 0.0
    %594 = vmatpush2.msra.mxu0 0.0
    %595 = vmatprep.subr.mxu0 0.0
    %596 = vmatpush2.msra.mxu0 0.0
    %597 = vmatprep.subr.mxu0 0.0
    %598 = vmatpush2.msra.mxu0 0.0
    %599 = vmatprep.subr.mxu0 0.0
    %600 = vmatpush2.msra.mxu0 0.0
    %601 = vmatprep.mubr.f32.mxu0 0.0
    %602 = vmatmul.mubr.f32.gmra.mxu0 %v535
    %v603 = vpop.f32.mrf.mxu0
    %v604 = vadd.f32 %v532, %v603
    %v605 = vpop.f32.mrf.mxu0
    %606 = vdwg.mxu0
    %607 = vst [vmem:[#allocation2] sm:$0x7] %v604
    // Predicated region
    $region34: #{tpu_custom_call.1} parent=1 // pred_check
      _
    $region35: #{tpu_custom_call.1} parent=1 // pred_check_branch
      %609 = sbr.rel (0) target = $region37
    $region36: #{tpu_custom_call.1} parent=1 // pred_region
      %s611 = ssub.s32 64, 64
      %612 = vsyncadd [#allocation3], %s611
      %s614 = sshll.u32 [#allocation2], 4
      %s615 = int_to_ptr.vmem [resolvable:$true] %s614
      %617 = dma.vmem_to_hbm [thread:$0]  %s615, 64, %s8, [#allocation3]
    $region37: #{tpu_custom_call.1} parent=1 // pred_fallthru
      _
    // Predicated region
    $region38: #{tpu_custom_call.1} parent=1 // pred_check
      _
    $region39: #{tpu_custom_call.1} parent=1 // pred_check_branch
      %619 = sbr.rel (0) target = $region41
    $region40: #{tpu_custom_call.1} parent=1 // pred_region
      %620 = dma.done [#allocation3], 64
    $region41: #{tpu_custom_call.1} parent=1 // pred_fallthru
      _
    %621 = vsyncpa [#allocation3], 1

</llo_original>
